<compile_context>
chip_gen: v7x
topology: tpu7x:2x2x1
jax: 0.10.0
libtpu: 0.0.40
codegen_flags: <defaults>
</compile_context>

<pallas_src>
import functools

import jax
import jax.numpy as jnp
from jax import lax
from jax.experimental import pallas as pl
from jax.experimental.pallas import tpu as pltpu


def _round_up(x, m):
    return ((x + m - 1) // m) * m


def _token_counts(tok_ref, tok, vocab_ids, T):
    """counts[b, v] = #positions t with tok[b, t] == vocab_ids[b, v] (f32)."""
    counts = jnp.zeros(vocab_ids.shape, jnp.float32)
    if T <= 64:
        # Short instruction sequences: static unroll, static lane slices only.
        for t in range(T):
            counts = counts + (vocab_ids == tok[:, t:t + 1]).astype(jnp.float32)
        return counts

    # Long sequences: bounded live ranges / compile size via fori_loop.
    def body(t, c):
        tok_t = tok_ref[:, pl.ds(t, 1)]                    # (tb, 1) dynamic read
        return c + (vocab_ids == tok_t).astype(jnp.float32)

    return lax.fori_loop(0, T, body, counts, unroll=8)


def _mean_bow_kernel(tok_ref, w_ref, o_ref, *,
                     inv_seq_len, padding_idx, tv_sub, cast_counts):
    # tok_ref: (tb, T)   int32 tokens                      (VMEM)
    # w_ref  : (tv, te)  table chunk (bf16/f32), streamed over grid axis 2
    # o_ref  : (tb, te)  f32 output, resident across axis 2 (in-place accumulator)
    tb, T = tok_ref.shape
    tv, _ = w_ref.shape
    k = pl.program_id(2)

    @pl.when(k == 0)
    def _():
        o_ref[...] = jnp.zeros_like(o_ref)

    tok = tok_ref[...]                                     # (tb, T) int32
    v_base = k * tv
    n_sub = tv // tv_sub                                   # static, small
    counts_dtype = w_ref.dtype if cast_counts else jnp.float32

    # Sub-tile the vocab (lane) axis: keeps the live f32 counts tile small
    # (tb x tv_sub) so the unrolled compare/add loop does not spill vregs.
    for s in range(n_sub):
        v0 = v_base + s * tv_sub
        vocab_ids = lax.broadcasted_iota(jnp.int32, (tb, tv_sub), 1) + v0

        counts = _token_counts(tok_ref, tok, vocab_ids, T)
        if padding_idx is not None:
            # nn.Embedding(padding_idx=...): that row contributes zero.
            counts = jnp.where(vocab_ids == padding_idx, 0.0, counts)

        # counts are small exact integers -> bf16 cast is lossless for T<=256.
        o_ref[...] += jnp.dot(counts.astype(counts_dtype),
                              w_ref[pl.ds(s * tv_sub, tv_sub), :],
                              preferred_element_type=jnp.float32)

    @pl.when(k == pl.num_programs(2) - 1)
    def _():
        o_ref[...] = o_ref[...] * inv_seq_len


def mean_bow_encode(tokens, emb_weight, *, padding_idx=None,
                    block_b=None, block_v=512, block_e=2048,
                    table_dtype=jnp.bfloat16):
    """tokens: (B, T) int; emb_weight: (V, E) float32 -> (B, E) float32."""
    tokens = tokens.astype(jnp.int32)
    B, T = tokens.shape
    V, E = emb_weight.shape
    itemsize = jnp.dtype(table_dtype).itemsize

    # ---- tile selection -----------------------------------------------------
    # Conservative VMEM budget: fits v5e's 16 MiB scoped default and v7x's
    # 64 MiB physical VMEM without raising vmem_limit_bytes.
    VMEM_BUDGET = 12 << 20

    E_pad = _round_up(E, 128)
    te_cap = _round_up(min(block_e, E_pad), 128)
    if E_pad <= te_cap:
        te = E_pad
    else:
        te = te_cap
        E_pad = _round_up(E_pad, te)          # pad E so E tiles divide evenly

    V8 = _round_up(V, 8)
    if V8 <= 128:
        tv = V8
        tv_sub = tv
    else:
        tv = min(_round_up(block_v, 128), _round_up(V, 128))
        # Double-buffered W stream should use at most ~1/3 of the budget.
        while tv > 128 and 2 * tv * te * itemsize > VMEM_BUDGET // 3:
            tv = max(128, _round_up(tv // 2, 128))
        tv_sub = 128

    # Batch tile as large as fits: fewer batch tiles -> fewer sweeps of the
    # table stream (the dominant HBM traffic).
    max_tb = 1024 if block_b is None else max(8, block_b)
    tb = min(_round_up(max_tb, 8), _round_up(B, 8))

    def _vmem_fits(tb_):
        w = 2 * tv * te * itemsize            # double-buffered table chunk
        out = 2 * tb_ * te * 4                # f32 output/accumulator block
        tok = 2 * tb_ * max(T, 1) * 4         # token tile
        live = 4 * tb_ * tv_sub * 4           # counts sub-tile + temps headroom
        return w + out + tok + live <= VMEM_BUDGET

    while tb > 8 and not _vmem_fits(tb):
        tb = max(8, _round_up(tb // 2, 8))

    B_pad = _round_up(B, tb)
    V_pad = _round_up(V, tv)

    # ---- operand prep (single pad+cast pass; no .at[padding_idx].set copy) --
    tok_p = tokens if B_pad == B else jnp.pad(tokens, ((0, B_pad - B), (0, 0)))
    w_p = emb_weight
    if (V_pad, E_pad) != (V, E):
        w_p = jnp.pad(w_p, ((0, V_pad - V), (0, E_pad - E)))
    w_p = w_p.astype(table_dtype)

    # bf16 holds integers exactly up to 256; beyond that keep counts in f32.
    cast_counts = (T <= 256) or (itemsize >= 4)

    kernel = functools.partial(
        _mean_bow_kernel,
        inv_seq_len=1.0 / float(T),
        padding_idx=padding_idx,
        tv_sub=tv_sub,
        cast_counts=cast_counts)

    out = pl.pallas_call(
        kernel,
        out_shape=jax.ShapeDtypeStruct((B_pad, E_pad), jnp.float32),
        grid_spec=pltpu.PrefetchScalarGridSpec(
            num_scalar_prefetch=0,
            grid=(B_pad // tb, E_pad // te, V_pad // tv),   # (B, E, V-reduction)
            in_specs=[
                pl.BlockSpec((tb, T), lambda i, e, k: (i, 0)),    # token rows
                pl.BlockSpec((tv, te), lambda i, e, k: (k, e)),   # W chunk (streamed)
            ],
            out_specs=pl.BlockSpec((tb, te), lambda i, e, k: (i, e)),  # resident acc
        ),
        compiler_params=pltpu.CompilerParams(
            dimension_semantics=("parallel", "parallel", "arbitrary")),
    )(tok_p, w_p)

    return out[:B, :E]


def reference_mean_bow(tokens, emb_weight):
    e = emb_weight[tokens]          # (B, T, E)
    return e.mean(axis=1)           # (B, E)


if __name__ == "__main__":
    # Module hyper-params (synthetic, deterministic, small).
    dict_size = 32      # V
    emb_size = 32       # E
    padding_idx = 0
    batch = 2           # B
    seq = 8             # T

    key = jax.random.PRNGKey(0)
    k_emb, k_tok = jax.random.split(key)

    # nn.Embedding default init: N(0, 1); padding_idx row zeroed.
    emb_weight = jax.random.normal(k_emb, (dict_size, emb_size), dtype=jnp.float32)
    emb_weight = emb_weight.at[padding_idx].set(0.0)

    # Token ids, with some padding tokens mixed in (simulated padded tail).
    tokens = jax.random.randint(k_tok, (batch, seq), 0, dict_size, dtype=jnp.int32)
    tokens = tokens.at[:, -2:].set(padding_idx)

    # `sizes` argument of the PyTorch forward is unused by the module.
    out = mean_bow_encode(tokens, emb_weight, padding_idx=padding_idx)
    out = jax.block_until_ready(out)
    assert out.shape == (batch, emb_size)

    # Exactness check against the same (bf16-rounded) table ...
    ref_bf16 = reference_mean_bow(
        tokens, emb_weight.astype(jnp.bfloat16).astype(jnp.float32))
    assert jnp.allclose(out, ref_bf16, atol=1e-4, rtol=1e-4), "mismatch vs bf16 reference"
    # ... and sanity check against the fp32 module semantics (bf16-table precision).
    ref_f32 = reference_mean_bow(tokens, emb_weight)
    assert jnp.allclose(out, ref_f32, atol=3e-2, rtol=3e-2), "mismatch vs fp32 reference"

    print("KERNEL_OK")
</pallas_src>

<mosaic_0001>
module attributes {stable_mosaic.version = 11 : i64} {
  func.func @_mean_bow_kernel(%arg0: i32, %arg1: i32, %arg2: i32, %arg3: memref<8x8xi32, #tpu.memory_space<vmem>>, %arg4: memref<32x128xbf16, #tpu.memory_space<vmem>>, %arg5: memref<8x128xf32, #tpu.memory_space<vmem>>) attributes {dimension_semantics = [#tpu.dimension_semantics<parallel>, #tpu.dimension_semantics<parallel>, #tpu.dimension_semantics<arbitrary>], iteration_bounds = array<i64: 1, 1, 1>, scalar_prefetch = 0 : i64, scratch_operands = 0 : i64, tpu.core_type = #tpu.core_type<tc>, window_params = [{transform_indices = @transform_0, window_bounds = array<i64: 8, 8>}, {transform_indices = @transform_1, window_bounds = array<i64: 32, 128>}, {transform_indices = @transform_2, window_bounds = array<i64: 8, 128>}]} {
    %c0_i32 = arith.constant 0 : i32
    %0 = arith.cmpi eq, %arg2, %c0_i32 : i32
    %1 = arith.extui %0 : i1 to i32
    %c0_i32_0 = arith.constant 0 : i32
    %2 = arith.cmpi ne, %1, %c0_i32_0 : i32
    scf.if %2 {
      %cst_14 = arith.constant 0.000000e+00 : f32
      %71 = vector.broadcast %cst_14 : f32 to vector<8x128xf32>
      %c0_15 = arith.constant 0 : index
      %c0_16 = arith.constant 0 : index
      %72 = vector.load %arg5[%c0_15, %c0_16] : memref<8x128xf32, #tpu.memory_space<vmem>>, vector<8x128xf32>
      tpu.vector_store %arg5[%c0_15, %c0_16], %71 {strides = array<i32>} : memref<8x128xf32, #tpu.memory_space<vmem>>, vector<8x128xf32>,
    } else {
    }
    %c0 = arith.constant 0 : index
    %c0_1 = arith.constant 0 : index
    %3 = vector.load %arg3[%c0, %c0_1] : memref<8x8xi32, #tpu.memory_space<vmem>>, vector<8x8xi32>
    %c32_i32 = arith.constant 32 : i32
    %4 = arith.muli %arg2, %c32_i32 : i32
    %c0_i32_2 = arith.constant 0 : i32
    %5 = arith.addi %4, %c0_i32_2 : i32
    %6 = tpu.iota {dimensions = array<i32: 1>} : vector<8x32xi32>
    %7 = vector.broadcast %5 : i32 to vector<8x32xi32>
    %8 = arith.addi %6, %7 : vector<8x32xi32>
    %cst = arith.constant 0.000000e+00 : f32
    %9 = vector.broadcast %cst : f32 to vector<8x32xf32>
    %10 = vector.extract_strided_slice %3 {offsets = [0, 0], sizes = [8, 1], strides = [1, 1]} : vector<8x8xi32> to vector<8x1xi32>
    %11 = vector.broadcast %10 : vector<8x1xi32> to vector<8x32xi32>
    %12 = arith.cmpi eq, %8, %11 : vector<8x32xi32>
    %13 = arith.extui %12 : vector<8x32xi1> to vector<8x32xi32>
    %14 = arith.sitofp %13 : vector<8x32xi32> to vector<8x32xf32>
    %15 = arith.addf %9, %14 : vector<8x32xf32>
    %16 = vector.extract_strided_slice %3 {offsets = [0, 1], sizes = [8, 1], strides = [1, 1]} : vector<8x8xi32> to vector<8x1xi32>
    %17 = vector.broadcast %16 : vector<8x1xi32> to vector<8x32xi32>
    %18 = arith.cmpi eq, %8, %17 : vector<8x32xi32>
    %19 = arith.extui %18 : vector<8x32xi1> to vector<8x32xi32>
    %20 = arith.sitofp %19 : vector<8x32xi32> to vector<8x32xf32>
    %21 = arith.addf %15, %20 : vector<8x32xf32>
    %22 = vector.extract_strided_slice %3 {offsets = [0, 2], sizes = [8, 1], strides = [1, 1]} : vector<8x8xi32> to vector<8x1xi32>
    %23 = vector.broadcast %22 : vector<8x1xi32> to vector<8x32xi32>
    %24 = arith.cmpi eq, %8, %23 : vector<8x32xi32>
    %25 = arith.extui %24 : vector<8x32xi1> to vector<8x32xi32>
    %26 = arith.sitofp %25 : vector<8x32xi32> to vector<8x32xf32>
    %27 = arith.addf %21, %26 : vector<8x32xf32>
    %28 = vector.extract_strided_slice %3 {offsets = [0, 3], sizes = [8, 1], strides = [1, 1]} : vector<8x8xi32> to vector<8x1xi32>
    %29 = vector.broadcast %28 : vector<8x1xi32> to vector<8x32xi32>
    %30 = arith.cmpi eq, %8, %29 : vector<8x32xi32>
    %31 = arith.extui %30 : vector<8x32xi1> to vector<8x32xi32>
    %32 = arith.sitofp %31 : vector<8x32xi32> to vector<8x32xf32>
    %33 = arith.addf %27, %32 : vector<8x32xf32>
    %34 = vector.extract_strided_slice %3 {offsets = [0, 4], sizes = [8, 1], strides = [1, 1]} : vector<8x8xi32> to vector<8x1xi32>
    %35 = vector.broadcast %34 : vector<8x1xi32> to vector<8x32xi32>
    %36 = arith.cmpi eq, %8, %35 : vector<8x32xi32>
    %37 = arith.extui %36 : vector<8x32xi1> to vector<8x32xi32>
    %38 = arith.sitofp %37 : vector<8x32xi32> to vector<8x32xf32>
    %39 = arith.addf %33, %38 : vector<8x32xf32>
    %40 = vector.extract_strided_slice %3 {offsets = [0, 5], sizes = [8, 1], strides = [1, 1]} : vector<8x8xi32> to vector<8x1xi32>
    %41 = vector.broadcast %40 : vector<8x1xi32> to vector<8x32xi32>
    %42 = arith.cmpi eq, %8, %41 : vector<8x32xi32>
    %43 = arith.extui %42 : vector<8x32xi1> to vector<8x32xi32>
    %44 = arith.sitofp %43 : vector<8x32xi32> to vector<8x32xf32>
    %45 = arith.addf %39, %44 : vector<8x32xf32>
    %46 = vector.extract_strided_slice %3 {offsets = [0, 6], sizes = [8, 1], strides = [1, 1]} : vector<8x8xi32> to vector<8x1xi32>
    %47 = vector.broadcast %46 : vector<8x1xi32> to vector<8x32xi32>
    %48 = arith.cmpi eq, %8, %47 : vector<8x32xi32>
    %49 = arith.extui %48 : vector<8x32xi1> to vector<8x32xi32>
    %50 = arith.sitofp %49 : vector<8x32xi32> to vector<8x32xf32>
    %51 = arith.addf %45, %50 : vector<8x32xf32>
    %52 = vector.extract_strided_slice %3 {offsets = [0, 7], sizes = [8, 1], strides = [1, 1]} : vector<8x8xi32> to vector<8x1xi32>
    %53 = vector.broadcast %52 : vector<8x1xi32> to vector<8x32xi32>
    %54 = arith.cmpi eq, %8, %53 : vector<8x32xi32>
    %55 = arith.extui %54 : vector<8x32xi1> to vector<8x32xi32>
    %56 = arith.sitofp %55 : vector<8x32xi32> to vector<8x32xf32>
    %57 = arith.addf %51, %56 : vector<8x32xf32>
    %c0_i32_3 = arith.constant 0 : i32
    %58 = vector.broadcast %c0_i32_3 : i32 to vector<8x32xi32>
    %59 = arith.cmpi eq, %8, %58 : vector<8x32xi32>
    %cst_4 = arith.constant 0.000000e+00 : f32
    %60 = vector.broadcast %cst_4 : f32 to vector<8x32xf32>
    %61 = arith.select %59, %60, %57 : vector<8x32xi1>, vector<8x32xf32>
    %c0_5 = arith.constant 0 : index
    %c0_6 = arith.constant 0 : index
    %62 = vector.load %arg5[%c0_5, %c0_6] : memref<8x128xf32, #tpu.memory_space<vmem>>, vector<8x128xf32>
    %63 = arith.truncf %61 : vector<8x32xf32> to vector<8x32xbf16>
    %c0_7 = arith.constant 0 : index
    %c0_8 = arith.constant 0 : index
    %64 = vector.load %arg4[%c0_7, %c0_8] : memref<32x128xbf16, #tpu.memory_space<vmem>>, vector<32x128xbf16>
    %cst_9 = arith.constant dense<0.000000e+00> : vector<8x128xf32>
    %65 = tpu.matmul %63, %64, %cst_9 {dimension_numbers = #tpu.dot_dimension_numbers<[1], [0], [0], [1], [0, 0, 1, 1], [], []>} : vector<8x32xbf16>, vector<32x128xbf16>, vector<8x128xf32> -> vector<8x128xf32>
    %66 = arith.addf %62, %65 : vector<8x128xf32>
    %c0_10 = arith.constant 0 : index
    %c0_11 = arith.constant 0 : index
    %67 = vector.load %arg5[%c0_10, %c0_11] : memref<8x128xf32, #tpu.memory_space<vmem>>, vector<8x128xf32>
    tpu.vector_store %arg5[%c0_10, %c0_11], %66 {strides = array<i32>} : memref<8x128xf32, #tpu.memory_space<vmem>>, vector<8x128xf32>,
    %c0_i32_12 = arith.constant 0 : i32
    %68 = arith.cmpi eq, %arg2, %c0_i32_12 : i32
    %69 = arith.extui %68 : i1 to i32
    %c0_i32_13 = arith.constant 0 : i32
    %70 = arith.cmpi ne, %69, %c0_i32_13 : i32
    scf.if %70 {
      %c0_14 = arith.constant 0 : index
      %c0_15 = arith.constant 0 : index
      %71 = vector.load %arg5[%c0_14, %c0_15] : memref<8x128xf32, #tpu.memory_space<vmem>>, vector<8x128xf32>
      %cst_16 = arith.constant 1.250000e-01 : f32
      %72 = vector.broadcast %cst_16 : f32 to vector<8x128xf32>
      %73 = arith.mulf %71, %72 : vector<8x128xf32>
      %c0_17 = arith.constant 0 : index
      %c0_18 = arith.constant 0 : index
      %74 = vector.load %arg5[%c0_17, %c0_18] : memref<8x128xf32, #tpu.memory_space<vmem>>, vector<8x128xf32>
      tpu.vector_store %arg5[%c0_17, %c0_18], %73 {strides = array<i32>} : memref<8x128xf32, #tpu.memory_space<vmem>>, vector<8x128xf32>,
    } else {
    }
    return
  }
  func.func @transform_0(%arg0: i32, %arg1: i32, %arg2: i32) -> (i32, i32) {
    %c0_i32 = arith.constant 0 : i32
    %c0_i32_0 = arith.constant 0 : i32
    return %arg0, %c0_i32 : i32, i32
  }
  func.func @transform_1(%arg0: i32, %arg1: i32, %arg2: i32) -> (i32, i32) {
    %c0_i32 = arith.constant 0 : i32
    return %arg2, %arg1 : i32, i32
  }
  func.func @transform_2(%arg0: i32, %arg1: i32, %arg2: i32) -> (i32, i32) {
    %c0_i32 = arith.constant 0 : i32
    return %arg0, %arg1 : i32, i32
  }
}

</mosaic_0001>

<llo_original>
// kernel: tpu_custom_call.1
$region0: #{tpu_custom_call.1}
  #allocation0 [shape = 'u32[]', space=smem, size = 0x4, offset = 0x4, fixed_abs, tag = 'smem constant byte address 0x4 - core index']
  #allocation1 [shape = 'u32[144,128]{1,0:T(1,128)}', space=vmem, size = 0x12000, scoped, tag = 'internal scratch']
  %s0 = inlined_call_operand.hbm [shape: s32[8,8], index: 0, kind: input, shape index: {}]
  %s1 = inlined_call_operand.hbm [shape: bf16[32,128], index: 1, kind: input, shape index: {}]
  %s2 = inlined_call_operand.hbm [shape: f32[8,128], index: 2, kind: output, shape index: {}]
  %s3 = sld [smem:[#allocation0]]
  $region34: #{tpu_custom_call.1} parent=0
    _
  %s5 = ssub.s32 1, %s3
  %s6 = scalar_select 0, %s5, %s3
  $region1: #{tpu_custom_call.1} parent=0
    #allocation2 [shape = 'u8[4096]{0}', space=vmem, size = 0x1000, scoped, tag = 'input window, operand 0, single buffered']
    #allocation3 [shape = 's32[1]{0}', space=sflag, size = 0x4, scoped, tag = 'scoped memory for tpu_custom_call.1']
    #allocation4 [shape = 's32[1]{0}', space=sflag, size = 0x4, scoped, tag = 'scoped memory for tpu_custom_call.1']
    #allocation5 [shape = 'u8[8192]{0}', space=vmem, size = 0x2000, scoped, tag = 'input window, operand 1, single buffered']
    #allocation6 [shape = 's32[1]{0}', space=sflag, size = 0x4, scoped, tag = 'scoped memory for tpu_custom_call.1']
    #allocation7 [shape = 'u8[4096]{0}', space=vmem, size = 0x1000, scoped, tag = 'output window, operand 0, single buffered']
    %7 = vsyncpa [#allocation3], 0
    %8 = vsyncpa [#allocation6], 0
    %9 = vsyncpa [#allocation4], 0
    // Predicated region
    $region2: #{tpu_custom_call.1} parent=1 // pred_check
      _
    $region3: #{tpu_custom_call.1} parent=1 // pred_check_branch
      %11 = sbr.rel (0) target = $region5
    $region4: #{tpu_custom_call.1} parent=1 // pred_region
      %s13 = ssub.s32 128, 128
      %14 = vsyncadd [#allocation3], %s13
      %s16 = sshll.u32 [#allocation2], 4
      %s17 = int_to_ptr.vmem [resolvable:$true] %s16
      %19 = dma.hbm_to_vmem [thread:$0]  %s0, 128, %s17, [#allocation3]
    $region5: #{tpu_custom_call.1} parent=1 // pred_fallthru
      _
    // Predicated region
    $region6: #{tpu_custom_call.1} parent=1 // pred_check
      _
    $region7: #{tpu_custom_call.1} parent=1 // pred_check_branch
      %21 = sbr.rel (0) target = $region9
    $region8: #{tpu_custom_call.1} parent=1 // pred_region
      %s23 = ssub.s32 256, 256
      %24 = vsyncadd [#allocation6], %s23
      %s25 = sshll.u32 [#allocation5], 4
      %s26 = int_to_ptr.vmem [resolvable:$true] %s25
      %31 = dma.hbm_to_vmem [thread:$0]  %s1, 256, %s26, [#allocation6], 64, 64, 4
    $region9: #{tpu_custom_call.1} parent=1 // pred_fallthru
      _
    // Predicated region
    $region10: #{tpu_custom_call.1} parent=1 // pred_check
      _
    $region11: #{tpu_custom_call.1} parent=1 // pred_check_branch
      %33 = sbr.rel (0) target = $region13
    $region12: #{tpu_custom_call.1} parent=1 // pred_region
      %34 = dma.done [#allocation3], 128
    $region13: #{tpu_custom_call.1} parent=1 // pred_fallthru
      _
    // Predicated region
    $region14: #{tpu_custom_call.1} parent=1 // pred_check
      _
    $region15: #{tpu_custom_call.1} parent=1 // pred_check_branch
      %36 = sbr.rel (0) target = $region17
    $region16: #{tpu_custom_call.1} parent=1 // pred_region
      %37 = dma.done [#allocation6], 256
    $region17: #{tpu_custom_call.1} parent=1 // pred_fallthru
      _
    %p39 = scmp.eq.s32.totalorder 0, 0
    // Predicated region
    $region18: #{tpu_custom_call.1} parent=1 // pred_check
      %p40 = pneg %p39
    $region19: #{tpu_custom_call.1} parent=1 // pred_check_branch
      %42 = sbr.rel (%p40) target = $region21
    $region20: #{tpu_custom_call.1} parent=1 // pred_region
      %43 = vst [vmem:[#allocation7] sm:$0xff] 0.0
    $region21: #{tpu_custom_call.1} parent=1 // pred_fallthru
      _
    %v44 = vld [vmem:[#allocation2] sm:$0xff]
    %s45 = smul.u32 0, 32
    %v46 = vlaneseq
    %v47 = vand.u32 %v46, 127
    %v48 = vstv %s45
    %v49 = vadd.s32 %v47, %v48
    %50 = vset.pattern.permute.xlu0 0
    %51 = vperm.xlu0 %50, %v44
    %v52 = vpop.permute.xlu0 %51
    %vm53 = vcmp.eq.s32.totalorder %v49, %v52
    %v54 = vsel %vm53, 1, 0
    %v55 = vcvt.s32.f32 %v54
    %v56 = vadd.f32 %v55, 0.0
    %57 = vset.pattern.permute.xlu0 1
    %58 = vperm.xlu0 %57, %v44
    %v59 = vpop.permute.xlu0 %58
    %vm60 = vcmp.eq.s32.totalorder %v49, %v59
    %v61 = vsel %vm60, 1, 0
    %v62 = vcvt.s32.f32 %v61
    %v63 = vadd.f32 %v56, %v62
    %64 = vset.pattern.permute.xlu0 2
    %65 = vperm.xlu0 %64, %v44
    %v66 = vpop.permute.xlu0 %65
    %vm67 = vcmp.eq.s32.totalorder %v49, %v66
    %v68 = vsel %vm67, 1, 0
    %v69 = vcvt.s32.f32 %v68
    %v70 = vadd.f32 %v63, %v69
    %71 = vset.pattern.permute.xlu0 3
    %72 = vperm.xlu0 %71, %v44
    %v73 = vpop.permute.xlu0 %72
    %vm74 = vcmp.eq.s32.totalorder %v49, %v73
    %v75 = vsel %vm74, 1, 0
    %v76 = vcvt.s32.f32 %v75
    %v77 = vadd.f32 %v70, %v76
    %78 = vset.pattern.permute.xlu0 4
    %79 = vperm.xlu0 %78, %v44
    %v80 = vpop.permute.xlu0 %79
    %vm81 = vcmp.eq.s32.totalorder %v49, %v80
    %v82 = vsel %vm81, 1, 0
    %v83 = vcvt.s32.f32 %v82
    %v84 = vadd.f32 %v77, %v83
    %85 = vset.pattern.permute.xlu0 5
    %86 = vperm.xlu0 %85, %v44
    %v87 = vpop.permute.xlu0 %86
    %vm88 = vcmp.eq.s32.totalorder %v49, %v87
    %v89 = vsel %vm88, 1, 0
    %v90 = vcvt.s32.f32 %v89
    %v91 = vadd.f32 %v84, %v90
    %92 = vset.pattern.permute.xlu0 6
    %93 = vperm.xlu0 %92, %v44
    %v94 = vpop.permute.xlu0 %93
    %vm95 = vcmp.eq.s32.totalorder %v49, %v94
    %v96 = vsel %vm95, 1, 0
    %v97 = vcvt.s32.f32 %v96
    %v98 = vadd.f32 %v91, %v97
    %99 = vset.pattern.permute.xlu0 7
    %100 = vperm.xlu0 %99, %v44
    %v101 = vpop.permute.xlu0 %100
    %vm102 = vcmp.eq.s32.totalorder %v49, %v101
    %v103 = vsel %vm102, 1, 0
    %v104 = vcvt.s32.f32 %v103
    %v105 = vadd.f32 %v98, %v104
    %vm106 = vcmp.eq.s32.totalorder %v49, 0
    %v107 = vsel %vm106, 0.0, %v105
    %v108 = vld [vmem:[#allocation7] sm:$0xff]
    %v109 = vpack.c.bf16 %v107, %v107
    %v110 = vld [vmem:[#allocation5] sm:$0xf]
    %v111 = vld [vmem:[#allocation5 + $0x4] sm:$0xf]
    %v112 = vld [vmem:[#allocation5 + $0x8] sm:$0xf]
    %v113 = vld [vmem:[#allocation5 + $0xc] sm:$0xf]
    %v118 = vunpack.c.l.b16 %v110
    %v119 = vunpack.c.l.b16 %v111
    %v120 = vunpack.c.l.b16 %v112
    %v121 = vunpack.c.l.b16 %v113
    %v122 = vpack.c.b16 %v119, %v118
    %v123 = vpack.c.b16 %v121, %v120
    %vm126 = vcmask 261120
    %v128 = vsel %vm126, %v109, 0
    %130 = vmatprep.subr.bf16.mxu0 0
    %131 = vmatpush1.bf16.msra.mxu0 %v122
    %132 = vmatprep.subr.bf16.mxu0 0
    %133 = vmatpush1.bf16.msra.mxu0 %v123
    %134 = vmatprep.subr.bf16.mxu0 0
    %135 = vmatpush1.bf16.msra.mxu0 0
    %136 = vmatprep.subr.bf16.mxu0 0
    %137 = vmatpush1.bf16.msra.mxu0 0
    %138 = vmatprep.subr.bf16.mxu0 0
    %139 = vmatpush1.bf16.msra.mxu0 0
    %140 = vmatprep.subr.bf16.mxu0 0
    %141 = vmatpush1.bf16.msra.mxu0 0
    %142 = vmatprep.subr.bf16.mxu0 0
    %143 = vmatpush1.bf16.msra.mxu0 0
    %144 = vmatprep.subr.bf16.mxu0 0
    %145 = vmatpush1.bf16.msra.mxu0 0
    %146 = vmatprep.subr.bf16.mxu0 0
    %147 = vmatpush1.bf16.msra.mxu0 0
    %148 = vmatprep.subr.bf16.mxu0 0
    %149 = vmatpush1.bf16.msra.mxu0 0
    %150 = vmatprep.subr.bf16.mxu0 0
    %151 = vmatpush1.bf16.msra.mxu0 0
    %152 = vmatprep.subr.bf16.mxu0 0
    %153 = vmatpush1.bf16.msra.mxu0 0
    %154 = vmatprep.subr.bf16.mxu0 0
    %155 = vmatpush1.bf16.msra.mxu0 0
    %156 = vmatprep.subr.bf16.mxu0 0
    %157 = vmatpush1.bf16.msra.mxu0 0
    %158 = vmatprep.subr.bf16.mxu0 0
    %159 = vmatpush1.bf16.msra.mxu0 0
    %160 = vmatprep.subr.bf16.mxu0 0
    %161 = vmatpush1.bf16.msra.mxu0 0
    %162 = vmatprep.mubr.bf16.mxu0 0
    %163 = vmatmul.mubr.bf16.gmra.mrb[0].mxu0 %v128
    %v164 = vpop.f32.mrb[0].mxu0
    %v165 = vadd.f32 0.0, %v164
    %v166 = vpop.f32.mrb[0].mxu0
    %v167 = vpop.f32.mrb[0].mxu0
    %v168 = vpop.f32.mrb[0].mxu0
    %169 = vdwg.mxu0
    %v170 = vadd.f32 %v108, %v165
    %171 = vst [vmem:[#allocation7] sm:$0xff] %v170
    // Predicated region
    $region22: #{tpu_custom_call.1} parent=1 // pred_check
      %p172 = pneg %p39
    $region23: #{tpu_custom_call.1} parent=1 // pred_check_branch
      %174 = sbr.rel (%p172) target = $region25
    $region24: #{tpu_custom_call.1} parent=1 // pred_region
      %v175 = vld [vmem:[#allocation7] sm:$0xff]
      %v176 = vmul.f32 %v175, 0.125
      %177 = vst [vmem:[#allocation7] sm:$0xff] %v176
    $region25: #{tpu_custom_call.1} parent=1 // pred_fallthru
      _
    // Predicated region
    $region26: #{tpu_custom_call.1} parent=1 // pred_check
      _
    $region27: #{tpu_custom_call.1} parent=1 // pred_check_branch
      %179 = sbr.rel (0) target = $region29
    $region28: #{tpu_custom_call.1} parent=1 // pred_region
      %s181 = ssub.s32 128, 128
      %182 = vsyncadd [#allocation4], %s181
      %s184 = sshll.u32 [#allocation7], 4
      %s185 = int_to_ptr.vmem [resolvable:$true] %s184
      %187 = dma.vmem_to_hbm [thread:$0]  %s185, 128, %s2, [#allocation4]
    $region29: #{tpu_custom_call.1} parent=1 // pred_fallthru
      _
    // Predicated region
    $region30: #{tpu_custom_call.1} parent=1 // pred_check
      _
    $region31: #{tpu_custom_call.1} parent=1 // pred_check_branch
      %189 = sbr.rel (0) target = $region33
    $region32: #{tpu_custom_call.1} parent=1 // pred_region
      %190 = dma.done [#allocation4], 128
    $region33: #{tpu_custom_call.1} parent=1 // pred_fallthru
      _
    %191 = vsyncpa [#allocation3], 1
    %192 = vsyncpa [#allocation6], 1
    %193 = vsyncpa [#allocation4], 1

</llo_original>
